<compile_context>
chip_gen: v7x
topology: tpu7x:2x2x1
jax: 0.10.0
libtpu: 0.0.40
codegen_flags: <defaults>
</compile_context>

<pallas_src>
import functools

import jax
import jax.numpy as jnp
from jax.experimental import pallas as pl
from jax.experimental.pallas import tpu as pltpu


def _graph_conv_kernel(*refs, pack, np_):
    # pack == 1 : refs = (x, S, wb, out)            wb = [w | b]  (T, 2)
    # pack  > 1 : refs = (x, S, wb, E, out)         wb = (T, 2*pack), E = (2*pack, 2*np_)
    if pack == 1:
        x_ref, s_ref, wb_ref, o_ref = refs
        e_ref = None
    else:
        x_ref, s_ref, wb_ref, e_ref, o_ref = refs

    # Main (lane-dense) matmul on the MXU, f32 accumulate.
    y = jnp.dot(x_ref[...], s_ref[...], preferred_element_type=jnp.float32)

    wb = wb_ref[...].astype(jnp.float32)
    if pack == 1:
        w = wb[:, 0:1]          # (T, 1) lane-broadcasts over F_out
        bb = wb[:, 1:2]
    else:
        # Expand per-row scale/bias to lane layout with one tiny matmul against
        # a constant 0/1 matrix; slice at the 128-lane (vreg) boundary.
        wbe = jnp.dot(wb, e_ref[...], preferred_element_type=jnp.float32)
        w = wbe[:, :np_]
        bb = wbe[:, np_:]

    o_ref[...] = (y * w + bb).astype(o_ref.dtype)   # fused scale + bias epilogue (VPU)


def graph_conv_layer(x, S, W, b, idx, *, tile_m=None, compute_dtype=None,
                     out_dtype=None):
    """out = x @ S * W[idx] + b[idx] as one fused Pallas call."""
    B, n_sel, f_in = x.shape
    f_out = S.shape[-1]
    out_dtype = x.dtype if out_dtype is None else out_dtype
    in_dtype = x.dtype if compute_dtype is None else compute_dtype
    # NOTE: compute_dtype only saves HBM traffic if x/S already live in that
    # dtype upstream (the cast itself is an extra HBM pass outside the kernel).
    x = x.astype(in_dtype)
    S = S.astype(in_dtype)

    M = B * n_sel

    # ---- lane packing factor (review item 2) --------------------------------
    pack = 1
    if f_out < 128 and 128 % f_out == 0:
        cand = 128 // f_out
        if M % cand == 0:
            pack = cand
    Mg = M // pack
    Kp = pack * f_in
    Np = pack * f_out

    # Packed x: row-major reshape, no data movement.
    x2 = x.reshape(Mg, Kp)
    # Block-diagonal S (resident in VMEM); identical to S when pack == 1.
    Sb = S if pack == 1 else jnp.kron(jnp.eye(pack, dtype=S.dtype), S)

    # Per-row scale / bias, packed per lane-group: (Mg, 2*pack) f32.
    w_row = jnp.broadcast_to(W[idx].reshape(1, n_sel), (B, n_sel)).reshape(Mg, pack)
    b_row = jnp.broadcast_to(b[idx].reshape(1, n_sel), (B, n_sel)).reshape(Mg, pack)
    wb = jnp.concatenate([w_row, b_row], axis=-1).astype(jnp.float32)

    # Constant lane-expansion matrix (only needed when packing).
    E = None
    if pack > 1:
        E = jnp.kron(jnp.eye(2 * pack, dtype=jnp.float32),
                     jnp.ones((1, f_out), jnp.float32))          # (2*pack, 2*Np)

    in_itemsize = jnp.dtype(in_dtype).itemsize
    out_itemsize = jnp.dtype(out_dtype).itemsize
    wb_itemsize = 4

    # ---- generation-aware VMEM budget (review item 5) -----------------------
    try:
        vmem_cap = int(pltpu.get_tpu_info().vmem_capacity_bytes)
    except Exception:
        vmem_cap = 64 << 20            # conservative (v7x-sized) fallback
    vmem_budget = vmem_cap * 3 // 4    # ~48 MiB on v7x, ~96 MiB on v5e/v6e

    def _vmem_need(tg):
        resident = Kp * Np * in_itemsize + (0 if pack == 1 else (2 * pack) * (2 * Np) * 4)
        per_step = tg * (Kp * in_itemsize + 2 * pack * wb_itemsize + Np * out_itemsize)
        return 2 * per_step + resident + (2 << 20)   # double-buffered + headroom

    # ---- tile sizing (review items 1, 3, 7) ---------------------------------
    sublane = max(8, 32 // min(in_itemsize, out_itemsize))   # 8 f32, 16 bf16
    per_row_bytes = Kp * in_itemsize + 2 * pack * wb_itemsize + Np * out_itemsize
    if tile_m is not None:
        tile_g = max(1, tile_m // pack)
    else:
        tile_g = max(sublane, (8 << 20) // per_row_bytes)     # ~8 MiB HBM per step
    while tile_g > sublane and _vmem_need(tile_g) > vmem_budget:
        tile_g = max(sublane, tile_g // 2)
    if tile_g >= Mg:
        tile_g = Mg                                           # full-extent block
    else:
        tile_g = max(sublane, (tile_g // sublane) * sublane)
    grid = (pl.cdiv(Mg, tile_g),)                             # ragged tail OK, no jnp.pad

    vmem_limit = int(min(max(_vmem_need(tile_g), 4 << 20), vmem_budget))

    flops = 2 * Mg * Kp * Np + (0 if pack == 1 else 2 * Mg * (2 * pack) * (2 * Np))
    bytes_accessed = (Mg * Kp * in_itemsize + Kp * Np * in_itemsize
                      + Mg * 2 * pack * wb_itemsize
                      + (0 if pack == 1 else (2 * pack) * (2 * Np) * 4)
                      + Mg * Np * out_itemsize)
    cost = pl.CostEstimate(flops=flops, transcendentals=0,
                           bytes_accessed=bytes_accessed)

    in_specs = [
        pl.BlockSpec((tile_g, Kp), lambda i: (i, 0)),          # x tile
        pl.BlockSpec((Kp, Np), lambda i: (0, 0)),              # S (resident)
        pl.BlockSpec((tile_g, 2 * pack), lambda i: (i, 0)),    # packed [w | b]
    ]
    operands = [x2, Sb, wb]
    if pack > 1:
        in_specs.append(pl.BlockSpec((2 * pack, 2 * Np), lambda i: (0, 0)))  # E resident
        operands.append(E)

    kernel = functools.partial(_graph_conv_kernel, pack=pack, np_=Np)

    out2 = pl.pallas_call(
        kernel,
        out_shape=jax.ShapeDtypeStruct((Mg, Np), out_dtype),
        grid=grid,
        in_specs=in_specs,
        out_specs=pl.BlockSpec((tile_g, Np), lambda i: (i, 0)),
        compiler_params=pltpu.CompilerParams(
            dimension_semantics=("parallel",),   # megacore sharding (verify on v7x)
            vmem_limit_bytes=vmem_limit,
        ),
        cost_estimate=cost,
    )(*operands)

    # (Mg, Np) is bit-identical row-major layout to (M, f_out): free reshape.
    return out2.reshape(B, n_sel, f_out)


def reference(x, S, W, b, idx):
    return x @ S * W[idx] + b[idx]


if __name__ == "__main__":
    key = jax.random.PRNGKey(0)

    def make_inputs(key, n_vars, B, n_sel, f_in, f_out, dtype=jnp.float32):
        k_x, k_s, k_w, k_b, k_i = jax.random.split(key, 5)
        # xavier_normal_ on (n_vars, 1): std = sqrt(2 / (fan_in + fan_out)),
        # fan_in = 1, fan_out = n_vars (PyTorch convention).
        std = (2.0 / (1.0 + n_vars)) ** 0.5
        W = std * jax.random.normal(k_w, (n_vars, 1), dtype=jnp.float32)
        b = std * jax.random.normal(k_b, (n_vars, 1), dtype=jnp.float32)
        x = jax.random.normal(k_x, (B, n_sel, f_in), dtype=dtype)
        S = jax.random.normal(k_s, (f_in, f_out), dtype=dtype)
        idx = jax.random.permutation(k_i, n_vars)[:n_sel]
        return x, S, W, b, idx

    k1, k2, k3, k4 = jax.random.split(key, 4)

    # 1) Small f32 case (lane-packed path, single full-extent tile).
    x, S, W, b, idx = make_inputs(k1, n_vars=8, B=2, n_sel=8, f_in=32, f_out=32)
    ref = reference(x, S, W, b, idx)
    out = jax.block_until_ready(graph_conv_layer(x, S, W, b, idx))
    assert out.shape == ref.shape == (2, 8, 32)
    assert jnp.allclose(out, ref, atol=1e-4, rtol=1e-5)

    # 2) Multi-tile grid with a ragged last block (no wrapper-side padding).
    x2_, S2_, W2_, b2_, idx2_ = make_inputs(k2, n_vars=64, B=3, n_sel=40,
                                            f_in=16, f_out=32)
    ref2 = reference(x2_, S2_, W2_, b2_, idx2_)
    out2 = jax.block_until_ready(
        graph_conv_layer(x2_, S2_, W2_, b2_, idx2_, tile_m=32))
    assert out2.shape == ref2.shape == (3, 40, 32)
    assert jnp.allclose(out2, ref2, atol=1e-4, rtol=1e-5)

    # 3) bf16 compute + bf16 output (halves HBM traffic; f32 accumulate/epilogue).
    out_bf16 = jax.block_until_ready(
        graph_conv_layer(x, S, W, b, idx,
                         compute_dtype=jnp.bfloat16, out_dtype=jnp.bfloat16))
    assert out_bf16.shape == ref.shape
    assert jnp.allclose(out_bf16.astype(jnp.float32), ref, atol=1.5e-1, rtol=5e-2)

    # 4) Fallback path (f_out does not divide 128 -> pack == 1).
    x4_, S4_, W4_, b4_, idx4_ = make_inputs(k4, n_vars=16, B=2, n_sel=8,
                                            f_in=32, f_out=48)
    ref4 = reference(x4_, S4_, W4_, b4_, idx4_)
    out4 = jax.block_until_ready(graph_conv_layer(x4_, S4_, W4_, b4_, idx4_))
    assert out4.shape == ref4.shape == (2, 8, 48)
    assert jnp.allclose(out4, ref4, atol=1e-4, rtol=1e-5)

    print("KERNEL_OK")
</pallas_src>

<mosaic_0001>
module attributes {stable_mosaic.version = 11 : i64} {
  func.func @_graph_conv_kernel(%arg0: i32, %arg1: memref<4x128xf32, #tpu.memory_space<vmem>>, %arg2: memref<128x128xf32, #tpu.memory_space<vmem>>, %arg3: memref<4x8xf32, #tpu.memory_space<vmem>>, %arg4: memref<8x256xf32, #tpu.memory_space<vmem>>, %arg5: memref<4x128xf32, #tpu.memory_space<vmem>>) attributes {dimension_semantics = [#tpu.dimension_semantics<parallel>], iteration_bounds = array<i64: 1>, scalar_prefetch = 0 : i64, scratch_operands = 0 : i64, tpu.core_type = #tpu.core_type<tc>, window_params = [{transform_indices = @transform_0, window_bounds = array<i64: 4, 128>}, {pipeline_mode = #tpu.pipeline_mode<synchronous>, transform_indices = @transform_1, window_bounds = array<i64: 128, 128>}, {transform_indices = @transform_2, window_bounds = array<i64: 4, 8>}, {pipeline_mode = #tpu.pipeline_mode<synchronous>, transform_indices = @transform_3, window_bounds = array<i64: 8, 256>}, {transform_indices = @transform_4, window_bounds = array<i64: 4, 128>}]} {
    %c0 = arith.constant 0 : index
    %c0_0 = arith.constant 0 : index
    %0 = vector.load %arg1[%c0, %c0_0] : memref<4x128xf32, #tpu.memory_space<vmem>>, vector<4x128xf32>
    %c0_1 = arith.constant 0 : index
    %c0_2 = arith.constant 0 : index
    %1 = vector.load %arg2[%c0_1, %c0_2] : memref<128x128xf32, #tpu.memory_space<vmem>>, vector<128x128xf32>
    %cst = arith.constant dense<0.000000e+00> : vector<4x128xf32>
    %2 = tpu.matmul %0, %1, %cst {dimension_numbers = #tpu.dot_dimension_numbers<[1], [0], [0], [1], [0, 0, 1, 1], [], []>} : vector<4x128xf32>, vector<128x128xf32>, vector<4x128xf32> -> vector<4x128xf32>
    %c0_3 = arith.constant 0 : index
    %c0_4 = arith.constant 0 : index
    %3 = vector.load %arg3[%c0_3, %c0_4] : memref<4x8xf32, #tpu.memory_space<vmem>>, vector<4x8xf32>
    %c0_5 = arith.constant 0 : index
    %c0_6 = arith.constant 0 : index
    %4 = vector.load %arg4[%c0_5, %c0_6] : memref<8x256xf32, #tpu.memory_space<vmem>>, vector<8x256xf32>
    %cst_7 = arith.constant dense<0.000000e+00> : vector<4x256xf32>
    %5 = tpu.matmul %3, %4, %cst_7 {dimension_numbers = #tpu.dot_dimension_numbers<[1], [0], [0], [1], [0, 0, 1, 1], [], []>} : vector<4x8xf32>, vector<8x256xf32>, vector<4x256xf32> -> vector<4x256xf32>
    %6 = vector.extract_strided_slice %5 {offsets = [0, 0], sizes = [4, 128], strides = [1, 1]} : vector<4x256xf32> to vector<4x128xf32>
    %7 = vector.extract_strided_slice %5 {offsets = [0, 128], sizes = [4, 128], strides = [1, 1]} : vector<4x256xf32> to vector<4x128xf32>
    %8 = arith.mulf %2, %6 : vector<4x128xf32>
    %9 = arith.addf %8, %7 : vector<4x128xf32>
    %c0_8 = arith.constant 0 : index
    %c0_9 = arith.constant 0 : index
    %10 = vector.load %arg5[%c0_8, %c0_9] : memref<4x128xf32, #tpu.memory_space<vmem>>, vector<4x128xf32>
    tpu.vector_store %arg5[%c0_8, %c0_9], %9 {strides = array<i32>} : memref<4x128xf32, #tpu.memory_space<vmem>>, vector<4x128xf32>,
    return
  }
  func.func @transform_0(%arg0: i32) -> (i32, i32) {
    %c0_i32 = arith.constant 0 : i32
    %c0_i32_0 = arith.constant 0 : i32
    return %arg0, %c0_i32 : i32, i32
  }
  func.func @transform_1(%arg0: i32) -> (i32, i32) {
    %c0_i32 = arith.constant 0 : i32
    %c0_i32_0 = arith.constant 0 : i32
    %c0_i32_1 = arith.constant 0 : i32
    return %c0_i32, %c0_i32_0 : i32, i32
  }
  func.func @transform_2(%arg0: i32) -> (i32, i32) {
    %c0_i32 = arith.constant 0 : i32
    %c0_i32_0 = arith.constant 0 : i32
    return %arg0, %c0_i32 : i32, i32
  }
  func.func @transform_3(%arg0: i32) -> (i32, i32) {
    %c0_i32 = arith.constant 0 : i32
    %c0_i32_0 = arith.constant 0 : i32
    %c0_i32_1 = arith.constant 0 : i32
    return %c0_i32, %c0_i32_0 : i32, i32
  }
  func.func @transform_4(%arg0: i32) -> (i32, i32) {
    %c0_i32 = arith.constant 0 : i32
    %c0_i32_0 = arith.constant 0 : i32
    return %arg0, %c0_i32 : i32, i32
  }
}

</mosaic_0001>

<llo_original>
// kernel: tpu_custom_call.1
$region0: #{tpu_custom_call.1}
  #allocation0 [shape = 'u32[]', space=smem, size = 0x4, offset = 0x4, fixed_abs, tag = 'smem constant byte address 0x4 - core index']
  #allocation1 [shape = 'u32[144,128]{1,0:T(1,128)}', space=vmem, size = 0x12000, scoped, tag = 'internal scratch']
  %s0 = inlined_call_operand.hbm [shape: f32[4,128], index: 0, kind: input, shape index: {}]
  %s1 = inlined_call_operand.hbm [shape: f32[128,128], index: 1, kind: input, shape index: {}]
  %s2 = inlined_call_operand.vmem [shape: f32[4,8], index: 2, kind: input, shape index: {}]
  %s3 = inlined_call_operand.hbm [shape: f32[8,256], index: 3, kind: input, shape index: {}]
  %s4 = inlined_call_operand.hbm [shape: f32[4,128], index: 4, kind: output, shape index: {}]
  %s5 = sld [smem:[#allocation0]]
  $region38: #{tpu_custom_call.1} parent=0
    _
  %s7 = ssub.s32 1, %s5
  %s8 = scalar_select 0, %s7, %s5
  $region1: #{tpu_custom_call.1} parent=0
    #allocation2 [shape = 'u8[2048]{0}', space=vmem, size = 0x800, scoped, tag = 'input window, operand 0, single buffered']
    #allocation3 [shape = 's32[1]{0}', space=sflag, size = 0x4, scoped, tag = 'scoped memory for tpu_custom_call.1']
    #allocation4 [shape = 's32[1]{0}', space=sflag, size = 0x4, scoped, tag = 'scoped memory for tpu_custom_call.1']
    #allocation5 [shape = 'u8[65536]{0}', space=vmem, size = 0x10000, scoped, tag = 'input window, operand 1, single buffered']
    #allocation6 [shape = 's32[1]{0}', space=sflag, size = 0x4, scoped, tag = 'scoped memory for tpu_custom_call.1']
    #allocation7 [shape = 'u8[8192]{0}', space=vmem, size = 0x2000, scoped, tag = 'input window, operand 3, single buffered']
    #allocation8 [shape = 'u8[2048]{0}', space=vmem, size = 0x800, scoped, tag = 'output window, operand 0, single buffered']
    %9 = vsyncpa [#allocation3], 0
    %10 = vsyncpa [#allocation6], 0
    %11 = vsyncpa [#allocation4], 0
    // Predicated region
    $region2: #{tpu_custom_call.1} parent=1 // pred_check
      _
    $region3: #{tpu_custom_call.1} parent=1 // pred_check_branch
      %13 = sbr.rel (0) target = $region5
    $region4: #{tpu_custom_call.1} parent=1 // pred_region
      %s15 = ssub.s32 64, 64
      %16 = vsyncadd [#allocation3], %s15
      %s18 = sshll.u32 [#allocation2], 4
      %s19 = int_to_ptr.vmem [resolvable:$true] %s18
      %21 = dma.hbm_to_vmem [thread:$0]  %s0, 64, %s19, [#allocation3]
    $region5: #{tpu_custom_call.1} parent=1 // pred_fallthru
      _
    // Predicated region
    $region6: #{tpu_custom_call.1} parent=1 // pred_check
      _
    $region7: #{tpu_custom_call.1} parent=1 // pred_check_branch
      %23 = sbr.rel (0) target = $region9
    $region8: #{tpu_custom_call.1} parent=1 // pred_region
      %s25 = ssub.s32 2048, 2048
      %26 = vsyncadd [#allocation6], %s25
      %s27 = sshll.u32 [#allocation5], 4
      %s28 = int_to_ptr.vmem [resolvable:$true] %s27
      %33 = dma.hbm_to_vmem [thread:$0]  %s1, 2048, %s28, [#allocation6], 128, 128, 8
    $region9: #{tpu_custom_call.1} parent=1 // pred_fallthru
      _
    // Predicated region
    $region10: #{tpu_custom_call.1} parent=1 // pred_check
      _
    $region11: #{tpu_custom_call.1} parent=1 // pred_check_branch
      %35 = sbr.rel (0) target = $region13
    $region12: #{tpu_custom_call.1} parent=1 // pred_region
      _
    $region13: #{tpu_custom_call.1} parent=1 // pred_fallthru
      _
    // Predicated region
    $region14: #{tpu_custom_call.1} parent=1 // pred_check
      _
    $region15: #{tpu_custom_call.1} parent=1 // pred_check_branch
      %37 = sbr.rel (0) target = $region17
    $region16: #{tpu_custom_call.1} parent=1 // pred_region
      %s39 = ssub.s32 256, 256
      %40 = vsyncadd [#allocation6], %s39
      %s42 = sshll.u32 [#allocation7], 4
      %s43 = int_to_ptr.vmem [resolvable:$true] %s42
      %45 = dma.hbm_to_vmem [thread:$0]  %s3, 256, %s43, [#allocation6]
    $region17: #{tpu_custom_call.1} parent=1 // pred_fallthru
      _
    // Predicated region
    $region18: #{tpu_custom_call.1} parent=1 // pred_check
      _
    $region19: #{tpu_custom_call.1} parent=1 // pred_check_branch
      %47 = sbr.rel (0) target = $region21
    $region20: #{tpu_custom_call.1} parent=1 // pred_region
      %48 = dma.done [#allocation3], 64
    $region21: #{tpu_custom_call.1} parent=1 // pred_fallthru
      _
    // Predicated region
    $region22: #{tpu_custom_call.1} parent=1 // pred_check
      _
    $region23: #{tpu_custom_call.1} parent=1 // pred_check_branch
      %50 = sbr.rel (0) target = $region25
    $region24: #{tpu_custom_call.1} parent=1 // pred_region
      %51 = dma.done [#allocation6], 2048
    $region25: #{tpu_custom_call.1} parent=1 // pred_fallthru
      _
    // Predicated region
    $region26: #{tpu_custom_call.1} parent=1 // pred_check
      _
    $region27: #{tpu_custom_call.1} parent=1 // pred_check_branch
      %53 = sbr.rel (0) target = $region29
    $region28: #{tpu_custom_call.1} parent=1 // pred_region
      %54 = dma.done [#allocation6], 256
    $region29: #{tpu_custom_call.1} parent=1 // pred_fallthru
      _
    %v55 = vld [vmem:[#allocation2] sm:$0xf]
    %v56 = vld [vmem:[#allocation5] sm:$0xff]
    %v57 = vld [vmem:[#allocation5 + $0x8] sm:$0xff]
    %v58 = vld [vmem:[#allocation5 + $0x10] sm:$0xff]
    %v59 = vld [vmem:[#allocation5 + $0x18] sm:$0xff]
    %v60 = vld [vmem:[#allocation5 + $0x20] sm:$0xff]
    %v61 = vld [vmem:[#allocation5 + $0x28] sm:$0xff]
    %v62 = vld [vmem:[#allocation5 + $0x30] sm:$0xff]
    %v63 = vld [vmem:[#allocation5 + $0x38] sm:$0xff]
    %v64 = vld [vmem:[#allocation5 + $0x40] sm:$0xff]
    %v65 = vld [vmem:[#allocation5 + $0x48] sm:$0xff]
    %v66 = vld [vmem:[#allocation5 + $0x50] sm:$0xff]
    %v67 = vld [vmem:[#allocation5 + $0x58] sm:$0xff]
    %v68 = vld [vmem:[#allocation5 + $0x60] sm:$0xff]
    %v69 = vld [vmem:[#allocation5 + $0x68] sm:$0xff]
    %v70 = vld [vmem:[#allocation5 + $0x70] sm:$0xff]
    %v71 = vld [vmem:[#allocation5 + $0x78] sm:$0xff]
    %72 = vmatprep.subr.mxu0 0.0
    %73 = vmatpush1.msra.mxu0 %v56
    %74 = vmatprep.subr.mxu0 0.0
    %75 = vmatpush1.msra.mxu0 %v57
    %76 = vmatprep.subr.mxu0 0.0
    %77 = vmatpush1.msra.mxu0 %v58
    %78 = vmatprep.subr.mxu0 0.0
    %79 = vmatpush1.msra.mxu0 %v59
    %80 = vmatprep.subr.mxu0 0.0
    %81 = vmatpush1.msra.mxu0 %v60
    %82 = vmatprep.subr.mxu0 0.0
    %83 = vmatpush1.msra.mxu0 %v61
    %84 = vmatprep.subr.mxu0 0.0
    %85 = vmatpush1.msra.mxu0 %v62
    %86 = vmatprep.subr.mxu0 0.0
    %87 = vmatpush1.msra.mxu0 %v63
    %88 = vmatprep.subr.mxu0 0.0
    %89 = vmatpush1.msra.mxu0 %v64
    %90 = vmatprep.subr.mxu0 0.0
    %91 = vmatpush1.msra.mxu0 %v65
    %92 = vmatprep.subr.mxu0 0.0
    %93 = vmatpush1.msra.mxu0 %v66
    %94 = vmatprep.subr.mxu0 0.0
    %95 = vmatpush1.msra.mxu0 %v67
    %96 = vmatprep.subr.mxu0 0.0
    %97 = vmatpush1.msra.mxu0 %v68
    %98 = vmatprep.subr.mxu0 0.0
    %99 = vmatpush1.msra.mxu0 %v69
    %100 = vmatprep.subr.mxu0 0.0
    %101 = vmatpush1.msra.mxu0 %v70
    %102 = vmatprep.subr.mxu0 0.0
    %103 = vmatpush1.msra.mxu0 %v71
    %104 = vmatprep.subr.mxu0 0.0
    %105 = vmatpush1.msra.mxu0 0.0
    %106 = vmatprep.subr.mxu0 0.0
    %107 = vmatpush1.msra.mxu0 0.0
    %108 = vmatprep.subr.mxu0 0.0
    %109 = vmatpush1.msra.mxu0 0.0
    %110 = vmatprep.subr.mxu0 0.0
    %111 = vmatpush1.msra.mxu0 0.0
    %112 = vmatprep.subr.mxu0 0.0
    %113 = vmatpush1.msra.mxu0 0.0
    %114 = vmatprep.subr.mxu0 0.0
    %115 = vmatpush1.msra.mxu0 0.0
    %116 = vmatprep.subr.mxu0 0.0
    %117 = vmatpush1.msra.mxu0 0.0
    %118 = vmatprep.subr.mxu0 0.0
    %119 = vmatpush1.msra.mxu0 0.0
    %120 = vmatprep.subr.mxu0 0.0
    %121 = vmatpush1.msra.mxu0 0.0
    %122 = vmatprep.subr.mxu0 0.0
    %123 = vmatpush1.msra.mxu0 0.0
    %124 = vmatprep.subr.mxu0 0.0
    %125 = vmatpush1.msra.mxu0 0.0
    %126 = vmatprep.subr.mxu0 0.0
    %127 = vmatpush1.msra.mxu0 0.0
    %128 = vmatprep.subr.mxu0 0.0
    %129 = vmatpush1.msra.mxu0 0.0
    %130 = vmatprep.subr.mxu0 0.0
    %131 = vmatpush1.msra.mxu0 0.0
    %132 = vmatprep.subr.mxu0 0.0
    %133 = vmatpush1.msra.mxu0 0.0
    %134 = vmatprep.subr.mxu0 0.0
    %135 = vmatpush1.msra.mxu0 0.0
    %136 = vmatprep.mubr.f32.mxu0 0.0
    %137 = vmatmul.mubr.f32.gmra.mrb[0].mxu0 %v55
    %v138 = vpop.f32.mrb[0].mxu0
    %v139 = vadd.f32 0.0, %v138
    %v140 = vpop.f32.mrb[0].mxu0
    %141 = vdwg.mxu0
    %v142 = vld [vmem:[%s2] sm:$0xf]
    %v143 = vld [vmem:[#allocation7] sm:$0xff]
    %v144 = vld [vmem:[#allocation7 + $0x8] sm:$0xff]
    %vm145 = vcmask 64512
    %v147 = vsel %vm145, %v142, 0
    %149 = vmatprep.subr.mxu0 %v144
    %150 = vmatpush1.msra.mxu0 %v143
    %151 = vmatprep.subr.mxu0 0.0
    %152 = vmatpush1.msra.mxu0 0.0
    %153 = vmatprep.subr.mxu0 0.0
    %154 = vmatpush1.msra.mxu0 0.0
    %155 = vmatprep.subr.mxu0 0.0
    %156 = vmatpush1.msra.mxu0 0.0
    %157 = vmatprep.subr.mxu0 0.0
    %158 = vmatpush1.msra.mxu0 0.0
    %159 = vmatprep.subr.mxu0 0.0
    %160 = vmatpush1.msra.mxu0 0.0
    %161 = vmatprep.subr.mxu0 0.0
    %162 = vmatpush1.msra.mxu0 0.0
    %163 = vmatprep.subr.mxu0 0.0
    %164 = vmatpush1.msra.mxu0 0.0
    %165 = vmatprep.subr.mxu0 0.0
    %166 = vmatpush1.msra.mxu0 0.0
    %167 = vmatprep.subr.mxu0 0.0
    %168 = vmatpush1.msra.mxu0 0.0
    %169 = vmatprep.subr.mxu0 0.0
    %170 = vmatpush1.msra.mxu0 0.0
    %171 = vmatprep.subr.mxu0 0.0
    %172 = vmatpush1.msra.mxu0 0.0
    %173 = vmatprep.subr.mxu0 0.0
    %174 = vmatpush1.msra.mxu0 0.0
    %175 = vmatprep.subr.mxu0 0.0
    %176 = vmatpush1.msra.mxu0 0.0
    %177 = vmatprep.subr.mxu0 0.0
    %178 = vmatpush1.msra.mxu0 0.0
    %179 = vmatprep.subr.mxu0 0.0
    %180 = vmatpush1.msra.mxu0 0.0
    %181 = vmatprep.subr.mxu0 0.0
    %182 = vmatpush1.msra.mxu0 0.0
    %183 = vmatprep.subr.mxu0 0.0
    %184 = vmatpush1.msra.mxu0 0.0
    %185 = vmatprep.subr.mxu0 0.0
    %186 = vmatpush1.msra.mxu0 0.0
    %187 = vmatprep.subr.mxu0 0.0
    %188 = vmatpush1.msra.mxu0 0.0
    %189 = vmatprep.subr.mxu0 0.0
    %190 = vmatpush1.msra.mxu0 0.0
    %191 = vmatprep.subr.mxu0 0.0
    %192 = vmatpush1.msra.mxu0 0.0
    %193 = vmatprep.subr.mxu0 0.0
    %194 = vmatpush1.msra.mxu0 0.0
    %195 = vmatprep.subr.mxu0 0.0
    %196 = vmatpush1.msra.mxu0 0.0
    %197 = vmatprep.subr.mxu0 0.0
    %198 = vmatpush1.msra.mxu0 0.0
    %199 = vmatprep.subr.mxu0 0.0
    %200 = vmatpush1.msra.mxu0 0.0
    %201 = vmatprep.subr.mxu0 0.0
    %202 = vmatpush1.msra.mxu0 0.0
    %203 = vmatprep.subr.mxu0 0.0
    %204 = vmatpush1.msra.mxu0 0.0
    %205 = vmatprep.subr.mxu0 0.0
    %206 = vmatpush1.msra.mxu0 0.0
    %207 = vmatprep.subr.mxu0 0.0
    %208 = vmatpush1.msra.mxu0 0.0
    %209 = vmatprep.subr.mxu0 0.0
    %210 = vmatpush1.msra.mxu0 0.0
    %211 = vmatprep.subr.mxu0 0.0
    %212 = vmatpush1.msra.mxu0 0.0
    %213 = vmatprep.mubr.f32.mxu0 0.0
    %214 = vmatmul.mubr.f32.gmra.mrb[0].mxu0 %v147
    %v215 = vpop.f32.mrb[0].mxu0
    %v216 = vadd.f32 0.0, %v215
    %v217 = vpop.f32.mrb[0].mxu0
    %v218 = vadd.f32 0.0, %v217
    %219 = vdwg.mxu0
    %v220 = vmul.f32 %v139, %v216
    %v221 = vadd.f32 %v220, %v218
    %222 = vst [vmem:[#allocation8] sm:$0xf] %v221
    // Predicated region
    $region30: #{tpu_custom_call.1} parent=1 // pred_check
      _
    $region31: #{tpu_custom_call.1} parent=1 // pred_check_branch
      %224 = sbr.rel (0) target = $region33
    $region32: #{tpu_custom_call.1} parent=1 // pred_region
      %s226 = ssub.s32 64, 64
      %227 = vsyncadd [#allocation4], %s226
      %s229 = sshll.u32 [#allocation8], 4
      %s230 = int_to_ptr.vmem [resolvable:$true] %s229
      %232 = dma.vmem_to_hbm [thread:$0]  %s230, 64, %s4, [#allocation4]
    $region33: #{tpu_custom_call.1} parent=1 // pred_fallthru
      _
    // Predicated region
    $region34: #{tpu_custom_call.1} parent=1 // pred_check
      _
    $region35: #{tpu_custom_call.1} parent=1 // pred_check_branch
      %234 = sbr.rel (0) target = $region37
    $region36: #{tpu_custom_call.1} parent=1 // pred_region
      %235 = dma.done [#allocation4], 64
    $region37: #{tpu_custom_call.1} parent=1 // pred_fallthru
      _
    %236 = vsyncpa [#allocation3], 1
    %237 = vsyncpa [#allocation6], 1
    %238 = vsyncpa [#allocation4], 1

</llo_original>
